<compile_context>
chip_gen: v5e
topology: v5e:2x2
jax: 0.10.0
libtpu: 0.0.40
codegen_flags: <defaults>
</compile_context>

<pallas_src>
import functools

import jax
import jax.numpy as jnp
from jax.experimental import pallas as pl
from jax.experimental.pallas import tpu as pltpu


def _round_up(x, m):
    return (x + m - 1) // m * m


def _ff_kernel(x_ref, w_in_ref, b_in_ref, w_out_ref, b_out_ref, o_ref, acc_ref):
    # x_ref:     (tm, Ep)
    # w_in_ref:  (Ep, tf)   -- pre-transposed W_in tile
    # b_in_ref:  (1, tf)
    # w_out_ref: (tf, Ep)   -- pre-transposed W_out tile
    # b_out_ref: (1, Ep)
    # o_ref:     (tm, Ep)
    # acc_ref:   (tm, Ep) f32 scratch, resident across the F (last, arbitrary) axis
    k = pl.program_id(1)

    @pl.when(k == 0)
    def _():
        # Fold the output-projection bias into the accumulator init
        # (hoists the broadcast+add out of the hot loop).
        acc_ref[...] = jnp.broadcast_to(
            b_out_ref[...].astype(jnp.float32), acc_ref.shape)

    # First projection: x @ W_in^T  ->  (tm, tf) in f32.
    h = jnp.dot(x_ref[...], w_in_ref[...], preferred_element_type=jnp.float32)
    h = jnp.maximum(h + b_in_ref[...].astype(jnp.float32), 0.0)  # bias + ReLU
    # Dropout (eval mode) -> identity.

    # Second projection (partial over this F-tile), accumulated in f32.
    acc_ref[...] += jnp.dot(h.astype(w_out_ref.dtype), w_out_ref[...],
                            preferred_element_type=jnp.float32)

    @pl.when(k == pl.num_programs(1) - 1)
    def _():
        o_ref[...] = acc_ref[...].astype(o_ref.dtype)


@functools.partial(jax.jit, static_argnames=("tm", "tf"))
def feed_forward(x, w_in, b_in, w_out, b_out, *, tm=256, tf=512):
    """x: [B, S, E] -> [B, S, E].  Weights in PyTorch nn.Linear layout:
    w_in: [F, E], w_out: [E, F]."""
    B, S, E = x.shape
    Fdim = w_in.shape[0]
    M = B * S

    # Padded / tile sizes (lane-dense last dims, sublane-aligned M).
    Ep = _round_up(E, 128)
    Fp = _round_up(Fdim, 128)
    tm_eff = min(tm, _round_up(M, 8))
    Mp = _round_up(M, tm_eff)
    tf_eff = min(tf, Fp)
    Fp = _round_up(Fp, tf_eff)

    # Pad + pre-transpose once in the wrapper (layout plumbing, not per-step).
    x2 = jnp.pad(x.reshape(M, E), ((0, Mp - M), (0, Ep - E)))
    w_in_t = jnp.pad(w_in.T, ((0, Ep - E), (0, Fp - Fdim)))     # [Ep, Fp]
    w_out_t = jnp.pad(w_out.T, ((0, Fp - Fdim), (0, Ep - E)))   # [Fp, Ep]
    b_in2 = jnp.pad(b_in.reshape(1, Fdim), ((0, 0), (0, Fp - Fdim)))
    b_out2 = jnp.pad(b_out.reshape(1, E), ((0, 0), (0, Ep - E)))

    grid = (Mp // tm_eff, Fp // tf_eff)

    out = pl.pallas_call(
        _ff_kernel,
        out_shape=jax.ShapeDtypeStruct((Mp, Ep), x.dtype),
        grid_spec=pltpu.PrefetchScalarGridSpec(
            num_scalar_prefetch=0,
            grid=grid,
            in_specs=[
                pl.BlockSpec((tm_eff, Ep), lambda i, k: (i, 0)),   # x row-tile
                pl.BlockSpec((Ep, tf_eff), lambda i, k: (0, k)),   # W_in^T F-tile
                pl.BlockSpec((1, tf_eff), lambda i, k: (0, k)),    # b_in F-tile
                pl.BlockSpec((tf_eff, Ep), lambda i, k: (k, 0)),   # W_out^T F-tile
                pl.BlockSpec((1, Ep), lambda i, k: (0, 0)),        # b_out
            ],
            out_specs=pl.BlockSpec((tm_eff, Ep), lambda i, k: (i, 0)),
            scratch_shapes=[pltpu.VMEM((tm_eff, Ep), jnp.float32)],
        ),
        compiler_params=pltpu.CompilerParams(
            dimension_semantics=("parallel", "arbitrary"),
            vmem_limit_bytes=64 * 1024 * 1024,
        ),
    )(x2, w_in_t, b_in2, w_out_t, b_out2)

    return out[:M, :E].reshape(B, S, E)


def _reference(x, w_in, b_in, w_out, b_out):
    h = jnp.maximum(jnp.einsum("bse,fe->bsf", x, w_in) + b_in, 0.0)
    return jnp.einsum("bsf,ef->bse", h, w_out) + b_out


if __name__ == "__main__":
    # Small, deterministic config (mirrors args.embed_dim / args.ff_dim).
    B, S = 2, 8
    embed_dim = 32
    ff_dim = 64

    key = jax.random.PRNGKey(0)
    k_x, k_win, k_wout = jax.random.split(key, 3)

    std = (2.0 / (ff_dim + embed_dim)) ** 0.5
    x = jax.random.normal(k_x, (B, S, embed_dim), dtype=jnp.float32)
    w_in = std * jax.random.normal(k_win, (ff_dim, embed_dim), dtype=jnp.float32)
    w_out = std * jax.random.normal(k_wout, (embed_dim, ff_dim), dtype=jnp.float32)
    b_in = jnp.zeros((ff_dim,), dtype=jnp.float32)   # nn.init.constant_(., 0.0)
    b_out = jnp.zeros((embed_dim,), dtype=jnp.float32)

    out = feed_forward(x, w_in, b_in, w_out, b_out)
    out = jax.block_until_ready(out)

    ref = _reference(x, w_in, b_in, w_out, b_out)
    assert out.shape == (B, S, embed_dim)
    assert jnp.allclose(out, ref, atol=1e-5, rtol=1e-5)

    print("KERNEL_OK")
</pallas_src>

<mosaic_0001>
module attributes {stable_mosaic.version = 11 : i64} {
  func.func @_ff_kernel(%arg0: i32, %arg1: i32, %arg2: memref<16x128xf32, #tpu.memory_space<vmem>>, %arg3: memref<128x128xf32, #tpu.memory_space<vmem>>, %arg4: memref<1x128xf32, #tpu.memory_space<vmem>>, %arg5: memref<128x128xf32, #tpu.memory_space<vmem>>, %arg6: memref<1x128xf32, #tpu.memory_space<vmem>>, %arg7: memref<16x128xf32, #tpu.memory_space<vmem>>, %arg8: memref<16x128xf32, #tpu.memory_space<vmem>>) attributes {dimension_semantics = [#tpu.dimension_semantics<parallel>, #tpu.dimension_semantics<arbitrary>], iteration_bounds = array<i64: 1, 1>, scalar_prefetch = 0 : i64, scratch_operands = 1 : i64, tpu.core_type = #tpu.core_type<tc>, window_params = [{transform_indices = @transform_0, window_bounds = array<i64: 16, 128>}, {transform_indices = @transform_1, window_bounds = array<i64: 128, 128>}, {transform_indices = @transform_2, window_bounds = array<i64: 1, 128>}, {transform_indices = @transform_3, window_bounds = array<i64: 128, 128>}, {pipeline_mode = #tpu.pipeline_mode<synchronous>, transform_indices = @transform_4, window_bounds = array<i64: 1, 128>}, {transform_indices = @transform_5, window_bounds = array<i64: 16, 128>}]} {
    %c0_i32 = arith.constant 0 : i32
    %0 = arith.cmpi eq, %arg1, %c0_i32 : i32
    %1 = arith.extui %0 : i1 to i32
    %c0_i32_0 = arith.constant 0 : i32
    %2 = arith.cmpi ne, %1, %c0_i32_0 : i32
    scf.if %2 {
      %c0_16 = arith.constant 0 : index
      %c0_17 = arith.constant 0 : index
      %19 = vector.load %arg6[%c0_16, %c0_17] : memref<1x128xf32, #tpu.memory_space<vmem>>, vector<1x128xf32>
      %20 = vector.shape_cast %19 : vector<1x128xf32> to vector<1x128xf32>
      %21 = vector.broadcast %20 : vector<1x128xf32> to vector<16x128xf32>
      %c0_18 = arith.constant 0 : index
      %c0_19 = arith.constant 0 : index
      %22 = vector.load %arg8[%c0_18, %c0_19] : memref<16x128xf32, #tpu.memory_space<vmem>>, vector<16x128xf32>
      tpu.vector_store %arg8[%c0_18, %c0_19], %21 {strides = array<i32>} : memref<16x128xf32, #tpu.memory_space<vmem>>, vector<16x128xf32>,
    } else {
    }
    %c0 = arith.constant 0 : index
    %c0_1 = arith.constant 0 : index
    %3 = vector.load %arg2[%c0, %c0_1] : memref<16x128xf32, #tpu.memory_space<vmem>>, vector<16x128xf32>
    %c0_2 = arith.constant 0 : index
    %c0_3 = arith.constant 0 : index
    %4 = vector.load %arg3[%c0_2, %c0_3] : memref<128x128xf32, #tpu.memory_space<vmem>>, vector<128x128xf32>
    %cst = arith.constant dense<0.000000e+00> : vector<16x128xf32>
    %5 = tpu.matmul %3, %4, %cst {dimension_numbers = #tpu.dot_dimension_numbers<[1], [0], [0], [1], [0, 0, 1, 1], [], []>} : vector<16x128xf32>, vector<128x128xf32>, vector<16x128xf32> -> vector<16x128xf32>
    %c0_4 = arith.constant 0 : index
    %c0_5 = arith.constant 0 : index
    %6 = vector.load %arg4[%c0_4, %c0_5] : memref<1x128xf32, #tpu.memory_space<vmem>>, vector<1x128xf32>
    %7 = vector.broadcast %6 : vector<1x128xf32> to vector<16x128xf32>
    %8 = arith.addf %5, %7 : vector<16x128xf32>
    %cst_6 = arith.constant 0.000000e+00 : f32
    %9 = vector.broadcast %cst_6 : f32 to vector<16x128xf32>
    %10 = arith.maximumf %8, %9 : vector<16x128xf32>
    %c0_7 = arith.constant 0 : index
    %c0_8 = arith.constant 0 : index
    %11 = vector.load %arg8[%c0_7, %c0_8] : memref<16x128xf32, #tpu.memory_space<vmem>>, vector<16x128xf32>
    %c0_9 = arith.constant 0 : index
    %c0_10 = arith.constant 0 : index
    %12 = vector.load %arg5[%c0_9, %c0_10] : memref<128x128xf32, #tpu.memory_space<vmem>>, vector<128x128xf32>
    %cst_11 = arith.constant dense<0.000000e+00> : vector<16x128xf32>
    %13 = tpu.matmul %10, %12, %cst_11 {dimension_numbers = #tpu.dot_dimension_numbers<[1], [0], [0], [1], [0, 0, 1, 1], [], []>} : vector<16x128xf32>, vector<128x128xf32>, vector<16x128xf32> -> vector<16x128xf32>
    %14 = arith.addf %11, %13 : vector<16x128xf32>
    %c0_12 = arith.constant 0 : index
    %c0_13 = arith.constant 0 : index
    %15 = vector.load %arg8[%c0_12, %c0_13] : memref<16x128xf32, #tpu.memory_space<vmem>>, vector<16x128xf32>
    tpu.vector_store %arg8[%c0_12, %c0_13], %14 {strides = array<i32>} : memref<16x128xf32, #tpu.memory_space<vmem>>, vector<16x128xf32>,
    %c0_i32_14 = arith.constant 0 : i32
    %16 = arith.cmpi eq, %arg1, %c0_i32_14 : i32
    %17 = arith.extui %16 : i1 to i32
    %c0_i32_15 = arith.constant 0 : i32
    %18 = arith.cmpi ne, %17, %c0_i32_15 : i32
    scf.if %18 {
      %c0_16 = arith.constant 0 : index
      %c0_17 = arith.constant 0 : index
      %19 = vector.load %arg8[%c0_16, %c0_17] : memref<16x128xf32, #tpu.memory_space<vmem>>, vector<16x128xf32>
      %c0_18 = arith.constant 0 : index
      %c0_19 = arith.constant 0 : index
      %20 = vector.load %arg7[%c0_18, %c0_19] : memref<16x128xf32, #tpu.memory_space<vmem>>, vector<16x128xf32>
      tpu.vector_store %arg7[%c0_18, %c0_19], %19 {strides = array<i32>} : memref<16x128xf32, #tpu.memory_space<vmem>>, vector<16x128xf32>,
    } else {
    }
    return
  }
  func.func @transform_0(%arg0: i32, %arg1: i32) -> (i32, i32) {
    %c0_i32 = arith.constant 0 : i32
    %c0_i32_0 = arith.constant 0 : i32
    return %arg0, %c0_i32 : i32, i32
  }
  func.func @transform_1(%arg0: i32, %arg1: i32) -> (i32, i32) {
    %c0_i32 = arith.constant 0 : i32
    %c0_i32_0 = arith.constant 0 : i32
    return %c0_i32, %arg1 : i32, i32
  }
  func.func @transform_2(%arg0: i32, %arg1: i32) -> (i32, i32) {
    %c0_i32 = arith.constant 0 : i32
    %c0_i32_0 = arith.constant 0 : i32
    return %c0_i32, %arg1 : i32, i32
  }
  func.func @transform_3(%arg0: i32, %arg1: i32) -> (i32, i32) {
    %c0_i32 = arith.constant 0 : i32
    %c0_i32_0 = arith.constant 0 : i32
    return %arg1, %c0_i32 : i32, i32
  }
  func.func @transform_4(%arg0: i32, %arg1: i32) -> (i32, i32) {
    %c0_i32 = arith.constant 0 : i32
    %c0_i32_0 = arith.constant 0 : i32
    %c0_i32_1 = arith.constant 0 : i32
    return %c0_i32, %c0_i32_0 : i32, i32
  }
  func.func @transform_5(%arg0: i32, %arg1: i32) -> (i32, i32) {
    %c0_i32 = arith.constant 0 : i32
    %c0_i32_0 = arith.constant 0 : i32
    return %arg0, %c0_i32 : i32, i32
  }
}

</mosaic_0001>

<llo_original>
// kernel: feed_forward.1
$region0: #{feed_forward.1}
  #allocation0 [shape = 'u32[]', space=smem, size = 0x4, offset = 0x4, fixed_abs, tag = 'smem constant byte address 0x4 - core index']
  #allocation1 [shape = 'u32[72,128]{1,0:T(1,128)}', space=vmem, size = 0x9000, scoped, tag = 'internal scratch']
  #allocation2 [shape = 'f32[16,128]{1,0:T(8,128)}', space=vmem, size = 0x2000, scoped, tag = 'scratch operand']
  %s0 = inlined_call_operand.vmem [shape: f32[16,128], index: 0, kind: input, shape index: {}]
  %s1 = inlined_call_operand.vmem [shape: f32[128,128], index: 1, kind: input, shape index: {}]
  %s2 = inlined_call_operand.vmem [shape: f32[1,128], index: 2, kind: input, shape index: {}]
  %s3 = inlined_call_operand.vmem [shape: f32[128,128], index: 3, kind: input, shape index: {}]
  %s4 = inlined_call_operand.vmem [shape: f32[1,128], index: 4, kind: input, shape index: {}]
  %s5 = inlined_call_operand.vmem [shape: f32[16,128], index: 5, kind: output, shape index: {}]
  %s6 = sld [smem:[#allocation0]]
  $region38: #{feed_forward.1} parent=0
    _
  %s8 = ssub.s32 1, %s6
  %s9 = scalar_select 0, %s8, %s6
  // Predicated region
  $region2: #{feed_forward.1} parent=0 // pred_check
    _
  $region3: #{feed_forward.1} parent=0 // pred_check_branch
    %11 = sbr.rel (0) target = $region5
  $region4: #{feed_forward.1} parent=0 // pred_region
    _
  $region5: #{feed_forward.1} parent=0 // pred_fallthru
    _
  // Predicated region
  $region6: #{feed_forward.1} parent=0 // pred_check
    _
  $region7: #{feed_forward.1} parent=0 // pred_check_branch
    %13 = sbr.rel (0) target = $region9
  $region8: #{feed_forward.1} parent=0 // pred_region
    _
  $region9: #{feed_forward.1} parent=0 // pred_fallthru
    _
  // Predicated region
  $region10: #{feed_forward.1} parent=0 // pred_check
    _
  $region11: #{feed_forward.1} parent=0 // pred_check_branch
    %15 = sbr.rel (0) target = $region13
  $region12: #{feed_forward.1} parent=0 // pred_region
    _
  $region13: #{feed_forward.1} parent=0 // pred_fallthru
    _
  // Predicated region
  $region14: #{feed_forward.1} parent=0 // pred_check
    _
  $region15: #{feed_forward.1} parent=0 // pred_check_branch
    %17 = sbr.rel (0) target = $region17
  $region16: #{feed_forward.1} parent=0 // pred_region
    _
  $region17: #{feed_forward.1} parent=0 // pred_fallthru
    _
  // Predicated region
  $region18: #{feed_forward.1} parent=0 // pred_check
    _
  $region19: #{feed_forward.1} parent=0 // pred_check_branch
    %19 = sbr.rel (0) target = $region21
  $region20: #{feed_forward.1} parent=0 // pred_region
    _
  $region21: #{feed_forward.1} parent=0 // pred_fallthru
    _
  %p20 = scmp.eq.s32.totalorder 0, 0
  // Predicated region
  $region22: #{feed_forward.1} parent=0 // pred_check
    %p21 = pneg %p20
  $region23: #{feed_forward.1} parent=0 // pred_check_branch
    %23 = sbr.rel (%p21) target = $region25
  $region24: #{feed_forward.1} parent=0 // pred_region
    %v24 = vld [vmem:[%s4] sm:$0x1]
    %v26 = vperm.slane %v24, 0
    %28 = vst [vmem:[#allocation2] sm:$0xff] %v26
    %29 = vst [vmem:[#allocation2 + $0x8] sm:$0xff] %v26
  $region25: #{feed_forward.1} parent=0 // pred_fallthru
    _
  %v30 = vld [vmem:[%s0] sm:$0xff]
  %v31 = vld [vmem:[%s0 + $0x8] sm:$0xff]
  %v32 = vld [vmem:[%s1] sm:$0xff]
  %v33 = vld [vmem:[%s1 + $0x8] sm:$0xff]
  %v34 = vld [vmem:[%s1 + $0x10] sm:$0xff]
  %v35 = vld [vmem:[%s1 + $0x18] sm:$0xff]
  %v36 = vld [vmem:[%s1 + $0x20] sm:$0xff]
  %v37 = vld [vmem:[%s1 + $0x28] sm:$0xff]
  %v38 = vld [vmem:[%s1 + $0x30] sm:$0xff]
  %v39 = vld [vmem:[%s1 + $0x38] sm:$0xff]
  %v40 = vld [vmem:[%s1 + $0x40] sm:$0xff]
  %v41 = vld [vmem:[%s1 + $0x48] sm:$0xff]
  %v42 = vld [vmem:[%s1 + $0x50] sm:$0xff]
  %v43 = vld [vmem:[%s1 + $0x58] sm:$0xff]
  %v44 = vld [vmem:[%s1 + $0x60] sm:$0xff]
  %v45 = vld [vmem:[%s1 + $0x68] sm:$0xff]
  %v46 = vld [vmem:[%s1 + $0x70] sm:$0xff]
  %v47 = vld [vmem:[%s1 + $0x78] sm:$0xff]
  %v48 = vld [vmem:[%s2] sm:$0x1]
  %v50 = vperm.slane %v48, 0
  %52 = vmatpush.msra.mxu0 %v47
  %53 = vmatpush.msra.mxu0 %v46
  %54 = vmatpush.msra.mxu0 %v45
  %55 = vmatpush.msra.mxu0 %v44
  %56 = vmatpush.msra.mxu0 %v43
  %57 = vmatpush.msra.mxu0 %v42
  %58 = vmatpush.msra.mxu0 %v41
  %59 = vmatpush.msra.mxu0 %v40
  %60 = vmatpush.msra.mxu0 %v39
  %61 = vmatpush.msra.mxu0 %v38
  %62 = vmatpush.msra.mxu0 %v37
  %63 = vmatpush.msra.mxu0 %v36
  %64 = vmatpush.msra.mxu0 %v35
  %65 = vmatpush.msra.mxu0 %v34
  %66 = vmatpush.msra.mxu0 %v33
  %67 = vmatpush.msra.mxu0 %v32
  %68 = vmatmul.f32.gmra.mxu0 %v30
  %v69 = vpop.f32.mrf.mxu0
  %v70 = vadd.f32 %v50, %v69
  %71 = vmatmul.f32.gmra.mxu0 %v31
  %v72 = vpop.f32.mrf.mxu0
  %v73 = vadd.f32 %v50, %v72
  %74 = vdwg.mxu0
  %v75 = vmax.f32 %v70, 0.0
  %v76 = vmax.f32 %v73, 0.0
  %v77 = vld [vmem:[#allocation2] sm:$0xff]
  %v78 = vld [vmem:[#allocation2 + $0x8] sm:$0xff]
  %v79 = vld [vmem:[%s3] sm:$0xff]
  %v80 = vld [vmem:[%s3 + $0x8] sm:$0xff]
  %v81 = vld [vmem:[%s3 + $0x10] sm:$0xff]
  %v82 = vld [vmem:[%s3 + $0x18] sm:$0xff]
  %v83 = vld [vmem:[%s3 + $0x20] sm:$0xff]
  %v84 = vld [vmem:[%s3 + $0x28] sm:$0xff]
  %v85 = vld [vmem:[%s3 + $0x30] sm:$0xff]
  %v86 = vld [vmem:[%s3 + $0x38] sm:$0xff]
  %v87 = vld [vmem:[%s3 + $0x40] sm:$0xff]
  %v88 = vld [vmem:[%s3 + $0x48] sm:$0xff]
  %v89 = vld [vmem:[%s3 + $0x50] sm:$0xff]
  %v90 = vld [vmem:[%s3 + $0x58] sm:$0xff]
  %v91 = vld [vmem:[%s3 + $0x60] sm:$0xff]
  %v92 = vld [vmem:[%s3 + $0x68] sm:$0xff]
  %v93 = vld [vmem:[%s3 + $0x70] sm:$0xff]
  %v94 = vld [vmem:[%s3 + $0x78] sm:$0xff]
  %95 = vmatpush.msra.mxu0 %v94
  %96 = vmatpush.msra.mxu0 %v93
  %97 = vmatpush.msra.mxu0 %v92
  %98 = vmatpush.msra.mxu0 %v91
  %99 = vmatpush.msra.mxu0 %v90
  %100 = vmatpush.msra.mxu0 %v89
  %101 = vmatpush.msra.mxu0 %v88
  %102 = vmatpush.msra.mxu0 %v87
  %103 = vmatpush.msra.mxu0 %v86
  %104 = vmatpush.msra.mxu0 %v85
  %105 = vmatpush.msra.mxu0 %v84
  %106 = vmatpush.msra.mxu0 %v83
  %107 = vmatpush.msra.mxu0 %v82
  %108 = vmatpush.msra.mxu0 %v81
  %109 = vmatpush.msra.mxu0 %v80
  %110 = vmatpush.msra.mxu0 %v79
  %111 = vmatmul.f32.gmra.mxu0 %v75
  %v112 = vpop.f32.mrf.mxu0
  %v113 = vadd.f32 0.0, %v112
  %114 = vmatmul.f32.gmra.mxu0 %v76
  %v115 = vpop.f32.mrf.mxu0
  %v116 = vadd.f32 0.0, %v115
  %117 = vdwg.mxu0
  %v118 = vadd.f32 %v77, %v113
  %v119 = vadd.f32 %v78, %v116
  %120 = vst [vmem:[#allocation2] sm:$0xff] %v118
  %121 = vst [vmem:[#allocation2 + $0x8] sm:$0xff] %v119
  // Predicated region
  $region26: #{feed_forward.1} parent=0 // pred_check
    %p122 = pneg %p20
  $region27: #{feed_forward.1} parent=0 // pred_check_branch
    %124 = sbr.rel (%p122) target = $region29
  $region28: #{feed_forward.1} parent=0 // pred_region
    %v125 = vld [vmem:[#allocation2] sm:$0xff]
    %v126 = vld [vmem:[#allocation2 + $0x8] sm:$0xff]
    %127 = vst [vmem:[%s5] sm:$0xff] %v125
    %128 = vst [vmem:[%s5 + $0x8] sm:$0xff] %v126
  $region29: #{feed_forward.1} parent=0 // pred_fallthru
    _
  // Predicated region
  $region30: #{feed_forward.1} parent=0 // pred_check
    _
  $region31: #{feed_forward.1} parent=0 // pred_check_branch
    %130 = sbr.rel (0) target = $region33
  $region32: #{feed_forward.1} parent=0 // pred_region
    _
  $region33: #{feed_forward.1} parent=0 // pred_fallthru
    _
  // Predicated region
  $region34: #{feed_forward.1} parent=0 // pred_check
    _
  $region35: #{feed_forward.1} parent=0 // pred_check_branch
    %132 = sbr.rel (0) target = $region37
  $region36: #{feed_forward.1} parent=0 // pred_region
    _
  $region37: #{feed_forward.1} parent=0 // pred_fallthru
    _

</llo_original>
